<compile_context>
chip_gen: v7x
topology: tpu7x:2x2x1
jax: 0.10.0
libtpu: 0.0.40
codegen_flags: <defaults>
</compile_context>

<pallas_src>
import jax
import jax.numpy as jnp
from jax.experimental import pallas as pl
from jax.experimental.pallas import tpu as pltpu

LANE = 128      # lane width: batch-tile granule (batch lives on the lane axis)
SUBLANE = 8     # f32 sublane width: output-row granule
MAX_TB = 4096   # max lanes per batch tile (keeps per-step VMEM to a few MiB on all chips)
MIN_GRID = 4    # target >= 4 grid steps: >= 2 per TensorCore on v7x + pipeline overlap


def _cdiv(a, b):
    return -(-a // b)


def _round_up(x, m):
    return ((x + m - 1) // m) * m


def cnn_regressor_kernel(x_ref, w1_ref, b1_ref, w2_ref, b2_ref,
                         w3_ref, b3_ref, w4_ref, b4_ref, o_ref):
    # Transposed chain: activations are (features, tb) so the final store is lane-dense.
    # x arrives f32 and is cast to bf16 on the VPU (free slot) to feed the MXU at full rate.
    # Matmuls accumulate in f32 on the MXU; bias + ReLU in f32, then re-cast to bf16 so the
    # inter-layer temporaries are half-width.
    # Note: the first dot has K=C (tiny) -> poor MXU utilization, but the kernel is not
    # MXU-bound; a VPU multiply-add path for layer 1 is a possible further micro-opt.
    x = x_ref[...].astype(jnp.bfloat16)                                   # (C, tb)
    h = jnp.dot(w1_ref[...], x, preferred_element_type=jnp.float32)       # conv1 (k=1)
    h = jnp.maximum(h + b1_ref[...], 0.0).astype(jnp.bfloat16)            # (32, tb)
    h = jnp.dot(w2_ref[...], h, preferred_element_type=jnp.float32)       # conv2 (k=1)
    h = jnp.maximum(h + b2_ref[...], 0.0).astype(jnp.bfloat16)            # (64, tb)
    h = jnp.dot(w3_ref[...], h, preferred_element_type=jnp.float32)       # fc1
    h = jnp.maximum(h + b3_ref[...], 0.0).astype(jnp.bfloat16)            # (128, tb)
    h = jnp.dot(w4_ref[...], h, preferred_element_type=jnp.float32)       # fc2
    o_ref[...] = (h + b4_ref[...]).astype(o_ref.dtype)                    # (OUT_SUB, tb)


def cnn_regressor_forward(x_ncl, params):
    """x_ncl: (B, C, 1) float32 — PyTorch NCL Conv1d input with L=1."""
    assert x_ncl.ndim == 3 and x_ncl.shape[2] == 1, "architecture requires L == 1"
    w1, b1, w2, b2, w3, b3, w4, b4 = params          # PyTorch-native (out, in) layouts
    B, C = x_ncl.shape[0], x_ncl.shape[1]
    num_outputs = w4.shape[0]

    # Final layer padded to one full sublane group so the (OUT_SUB, tb) store is dense.
    # The extra rows are exact zeros and are sliced off below.
    out_sub = _round_up(num_outputs, SUBLANE)
    w4p = jnp.zeros((out_sub, w4.shape[1]), w4.dtype).at[:num_outputs].set(w4)
    b4p = jnp.zeros((out_sub,), b4.dtype).at[:num_outputs].set(b4)

    # Balanced batch tile: at least MIN_GRID steps when B allows, capped at MAX_TB, rounded to
    # the 128-lane granule so padded work stays bounded.
    n_steps = max(MIN_GRID, _cdiv(B, MAX_TB))
    tb = min(MAX_TB, max(LANE, _round_up(_cdiv(B, n_steps), LANE)))
    n_tiles = _cdiv(B, tb)
    b_pad = n_tiles * tb

    # The only wrapper-side pass over x: transpose batch onto the lane axis, zero-pad fused in.
    # No f32->bf16 cast here — that happens in-kernel on the VPU.
    xT = jnp.zeros((C, b_pad), jnp.float32).at[:, :B].set(
        x_ncl[:, :, 0].astype(jnp.float32).T)

    # Weights feed the MXU in bf16; biases stay f32, shaped (rows, 1) to broadcast over lanes.
    w1b, w2b, w3b, w4b = (w.astype(jnp.bfloat16) for w in (w1, w2, w3, w4p))
    b1f, b2f, b3f, b4f = (b.astype(jnp.float32).reshape(-1, 1) for b in (b1, b2, b3, b4p))

    def resident(arr):
        # Weights/biases: same block every grid step -> stay VMEM-resident.
        return pl.BlockSpec(arr.shape, lambda i: (0,) * arr.ndim)

    out = pl.pallas_call(
        cnn_regressor_kernel,
        out_shape=jax.ShapeDtypeStruct((out_sub, b_pad), jnp.float32),
        grid=(n_tiles,),
        in_specs=[
            pl.BlockSpec((C, tb), lambda i: (0, i)),     # x tile, double-buffered
            resident(w1b), resident(b1f),
            resident(w2b), resident(b2f),
            resident(w3b), resident(b3f),
            resident(w4b), resident(b4f),
        ],
        out_specs=pl.BlockSpec((out_sub, tb), lambda i: (0, i)),
        compiler_params=pltpu.CompilerParams(
            dimension_semantics=("parallel",),           # batch axis shards across TCs (v7x)
            vmem_limit_bytes=32 * 1024 * 1024,           # ample headroom; budget is a few MiB
        ),
    )(xT, w1b, b1f, w2b, b2f, w3b, b3f, w4b, b4f)

    # Drop sublane + batch padding, return in the PyTorch (B, num_outputs) orientation.
    return out[:num_outputs, :B].T


def init_params(input_channels, num_outputs=1, seed=0):
    """Deterministic synthetic init; shapes/layouts match the PyTorch module (out, in)."""
    key = jax.random.PRNGKey(seed)
    ks = jax.random.split(key, 8)

    def uniform(k, shape, fan_in):
        bound = 1.0 / jnp.sqrt(jnp.float32(fan_in))
        return jax.random.uniform(k, shape, jnp.float32, -bound, bound)

    # Conv1d(C, 32, k=1): weight (32, C[,1]) squeezed
    w1 = uniform(ks[0], (32, input_channels), input_channels)
    b1 = uniform(ks[1], (32,), input_channels)
    # Conv1d(32, 64, k=1)
    w2 = uniform(ks[2], (64, 32), 32)
    b2 = uniform(ks[3], (64,), 32)
    # Linear(64, 128)
    w3 = uniform(ks[4], (128, 64), 64)
    b3 = uniform(ks[5], (128,), 64)
    # Linear(128, num_outputs)
    w4 = uniform(ks[6], (num_outputs, 128), 128)
    b4 = uniform(ks[7], (num_outputs,), 128)
    return (w1, b1, w2, b2, w3, b3, w4, b4)


def reference_forward(x_ncl, params):
    """Pure-JAX f32 reference of the PyTorch forward for validation."""
    w1, b1, w2, b2, w3, b3, w4, b4 = params
    x = x_ncl[:, :, 0]                               # (B, C)
    h = jax.nn.relu(x @ w1.T + b1)
    h = jax.nn.relu(h @ w2.T + b2)
    h = jax.nn.relu(h @ w3.T + b3)
    return h @ w4.T + b4


if __name__ == "__main__":
    batch = 2
    input_channels = 4
    num_outputs = 1

    key = jax.random.PRNGKey(0)
    # PyTorch-style NCL input with L=1 (train_model unsqueezes (B, C) -> (B, C, 1))
    x = jax.random.normal(key, (batch, input_channels, 1), dtype=jnp.float32)
    params = init_params(input_channels, num_outputs, seed=0)

    out = cnn_regressor_forward(x, params)
    out = jax.block_until_ready(out)
    ref = reference_forward(x, params)
    assert out.shape == (batch, num_outputs)
    # bf16 operands/activations with f32 MXU accumulation -> loosened tolerance vs f32 reference
    assert jnp.allclose(out, ref, atol=5e-2, rtol=5e-2), "mismatch vs reference"

    # Also exercise the multi-tile grid + partial-batch padding path.
    x2 = jax.random.normal(jax.random.PRNGKey(1), (260, input_channels, 1), dtype=jnp.float32)
    out2 = jax.block_until_ready(cnn_regressor_forward(x2, params))
    ref2 = reference_forward(x2, params)
    assert out2.shape == (260, num_outputs)
    assert jnp.allclose(out2, ref2, atol=5e-2, rtol=5e-2), "mismatch vs reference (multi-tile)"

    print("KERNEL_OK")
</pallas_src>

<mosaic_0001>
module attributes {stable_mosaic.version = 11 : i64} {
  func.func @cnn_regressor_kernel(%arg0: i32, %arg1: memref<4x128xf32, #tpu.memory_space<vmem>>, %arg2: memref<32x4xbf16, #tpu.memory_space<vmem>>, %arg3: memref<32x1xf32, #tpu.memory_space<vmem>>, %arg4: memref<64x32xbf16, #tpu.memory_space<vmem>>, %arg5: memref<64x1xf32, #tpu.memory_space<vmem>>, %arg6: memref<128x64xbf16, #tpu.memory_space<vmem>>, %arg7: memref<128x1xf32, #tpu.memory_space<vmem>>, %arg8: memref<8x128xbf16, #tpu.memory_space<vmem>>, %arg9: memref<8x1xf32, #tpu.memory_space<vmem>>, %arg10: memref<8x128xf32, #tpu.memory_space<vmem>>) attributes {dimension_semantics = [#tpu.dimension_semantics<parallel>], iteration_bounds = array<i64: 1>, scalar_prefetch = 0 : i64, scratch_operands = 0 : i64, tpu.core_type = #tpu.core_type<tc>, window_params = [{transform_indices = @transform_0, window_bounds = array<i64: 4, 128>}, {pipeline_mode = #tpu.pipeline_mode<synchronous>, transform_indices = @transform_1, window_bounds = array<i64: 32, 4>}, {pipeline_mode = #tpu.pipeline_mode<synchronous>, transform_indices = @transform_2, window_bounds = array<i64: 32, 1>}, {pipeline_mode = #tpu.pipeline_mode<synchronous>, transform_indices = @transform_3, window_bounds = array<i64: 64, 32>}, {pipeline_mode = #tpu.pipeline_mode<synchronous>, transform_indices = @transform_4, window_bounds = array<i64: 64, 1>}, {pipeline_mode = #tpu.pipeline_mode<synchronous>, transform_indices = @transform_5, window_bounds = array<i64: 128, 64>}, {pipeline_mode = #tpu.pipeline_mode<synchronous>, transform_indices = @transform_6, window_bounds = array<i64: 128, 1>}, {pipeline_mode = #tpu.pipeline_mode<synchronous>, transform_indices = @transform_7, window_bounds = array<i64: 8, 128>}, {pipeline_mode = #tpu.pipeline_mode<synchronous>, transform_indices = @transform_8, window_bounds = array<i64: 8, 1>}, {transform_indices = @transform_9, window_bounds = array<i64: 8, 128>}]} {
    %c0 = arith.constant 0 : index
    %c0_0 = arith.constant 0 : index
    %0 = vector.load %arg1[%c0, %c0_0] : memref<4x128xf32, #tpu.memory_space<vmem>>, vector<4x128xf32>
    %1 = arith.truncf %0 : vector<4x128xf32> to vector<4x128xbf16>
    %c0_1 = arith.constant 0 : index
    %c0_2 = arith.constant 0 : index
    %2 = vector.load %arg2[%c0_1, %c0_2] : memref<32x4xbf16, #tpu.memory_space<vmem>>, vector<32x4xbf16>
    %cst = arith.constant dense<0.000000e+00> : vector<32x128xf32>
    %3 = tpu.matmul %2, %1, %cst {dimension_numbers = #tpu.dot_dimension_numbers<[1], [0], [0], [1], [0, 0, 1, 1], [], []>} : vector<32x4xbf16>, vector<4x128xbf16>, vector<32x128xf32> -> vector<32x128xf32>
    %c0_3 = arith.constant 0 : index
    %c0_4 = arith.constant 0 : index
    %4 = vector.load %arg3[%c0_3, %c0_4] : memref<32x1xf32, #tpu.memory_space<vmem>>, vector<32x1xf32>
    %5 = vector.broadcast %4 : vector<32x1xf32> to vector<32x128xf32>
    %6 = arith.addf %3, %5 : vector<32x128xf32>
    %cst_5 = arith.constant 0.000000e+00 : f32
    %7 = vector.broadcast %cst_5 : f32 to vector<32x128xf32>
    %8 = arith.maximumf %6, %7 : vector<32x128xf32>
    %9 = arith.truncf %8 : vector<32x128xf32> to vector<32x128xbf16>
    %c0_6 = arith.constant 0 : index
    %c0_7 = arith.constant 0 : index
    %10 = vector.load %arg4[%c0_6, %c0_7] : memref<64x32xbf16, #tpu.memory_space<vmem>>, vector<64x32xbf16>
    %cst_8 = arith.constant dense<0.000000e+00> : vector<64x128xf32>
    %11 = tpu.matmul %10, %9, %cst_8 {dimension_numbers = #tpu.dot_dimension_numbers<[1], [0], [0], [1], [0, 0, 1, 1], [], []>} : vector<64x32xbf16>, vector<32x128xbf16>, vector<64x128xf32> -> vector<64x128xf32>
    %c0_9 = arith.constant 0 : index
    %c0_10 = arith.constant 0 : index
    %12 = vector.load %arg5[%c0_9, %c0_10] : memref<64x1xf32, #tpu.memory_space<vmem>>, vector<64x1xf32>
    %13 = vector.broadcast %12 : vector<64x1xf32> to vector<64x128xf32>
    %14 = arith.addf %11, %13 : vector<64x128xf32>
    %cst_11 = arith.constant 0.000000e+00 : f32
    %15 = vector.broadcast %cst_11 : f32 to vector<64x128xf32>
    %16 = arith.maximumf %14, %15 : vector<64x128xf32>
    %17 = arith.truncf %16 : vector<64x128xf32> to vector<64x128xbf16>
    %c0_12 = arith.constant 0 : index
    %c0_13 = arith.constant 0 : index
    %18 = vector.load %arg6[%c0_12, %c0_13] : memref<128x64xbf16, #tpu.memory_space<vmem>>, vector<128x64xbf16>
    %cst_14 = arith.constant dense<0.000000e+00> : vector<128x128xf32>
    %19 = tpu.matmul %18, %17, %cst_14 {dimension_numbers = #tpu.dot_dimension_numbers<[1], [0], [0], [1], [0, 0, 1, 1], [], []>} : vector<128x64xbf16>, vector<64x128xbf16>, vector<128x128xf32> -> vector<128x128xf32>
    %c0_15 = arith.constant 0 : index
    %c0_16 = arith.constant 0 : index
    %20 = vector.load %arg7[%c0_15, %c0_16] : memref<128x1xf32, #tpu.memory_space<vmem>>, vector<128x1xf32>
    %21 = vector.broadcast %20 : vector<128x1xf32> to vector<128x128xf32>
    %22 = arith.addf %19, %21 : vector<128x128xf32>
    %cst_17 = arith.constant 0.000000e+00 : f32
    %23 = vector.broadcast %cst_17 : f32 to vector<128x128xf32>
    %24 = arith.maximumf %22, %23 : vector<128x128xf32>
    %25 = arith.truncf %24 : vector<128x128xf32> to vector<128x128xbf16>
    %c0_18 = arith.constant 0 : index
    %c0_19 = arith.constant 0 : index
    %26 = vector.load %arg8[%c0_18, %c0_19] : memref<8x128xbf16, #tpu.memory_space<vmem>>, vector<8x128xbf16>
    %cst_20 = arith.constant dense<0.000000e+00> : vector<8x128xf32>
    %27 = tpu.matmul %26, %25, %cst_20 {dimension_numbers = #tpu.dot_dimension_numbers<[1], [0], [0], [1], [0, 0, 1, 1], [], []>} : vector<8x128xbf16>, vector<128x128xbf16>, vector<8x128xf32> -> vector<8x128xf32>
    %c0_21 = arith.constant 0 : index
    %c0_22 = arith.constant 0 : index
    %28 = vector.load %arg9[%c0_21, %c0_22] : memref<8x1xf32, #tpu.memory_space<vmem>>, vector<8x1xf32>
    %29 = vector.broadcast %28 : vector<8x1xf32> to vector<8x128xf32>
    %30 = arith.addf %27, %29 : vector<8x128xf32>
    %c0_23 = arith.constant 0 : index
    %c0_24 = arith.constant 0 : index
    %31 = vector.load %arg10[%c0_23, %c0_24] : memref<8x128xf32, #tpu.memory_space<vmem>>, vector<8x128xf32>
    tpu.vector_store %arg10[%c0_23, %c0_24], %30 {strides = array<i32>} : memref<8x128xf32, #tpu.memory_space<vmem>>, vector<8x128xf32>,
    return
  }
  func.func @transform_0(%arg0: i32) -> (i32, i32) {
    %c0_i32 = arith.constant 0 : i32
    %c0_i32_0 = arith.constant 0 : i32
    return %c0_i32, %arg0 : i32, i32
  }
  func.func @transform_1(%arg0: i32) -> (i32, i32) {
    %c0_i32 = arith.constant 0 : i32
    %c0_i32_0 = arith.constant 0 : i32
    %c0_i32_1 = arith.constant 0 : i32
    return %c0_i32, %c0_i32_0 : i32, i32
  }
  func.func @transform_2(%arg0: i32) -> (i32, i32) {
    %c0_i32 = arith.constant 0 : i32
    %c0_i32_0 = arith.constant 0 : i32
    %c0_i32_1 = arith.constant 0 : i32
    return %c0_i32, %c0_i32_0 : i32, i32
  }
  func.func @transform_3(%arg0: i32) -> (i32, i32) {
    %c0_i32 = arith.constant 0 : i32
    %c0_i32_0 = arith.constant 0 : i32
    %c0_i32_1 = arith.constant 0 : i32
    return %c0_i32, %c0_i32_0 : i32, i32
  }
  func.func @transform_4(%arg0: i32) -> (i32, i32) {
    %c0_i32 = arith.constant 0 : i32
    %c0_i32_0 = arith.constant 0 : i32
    %c0_i32_1 = arith.constant 0 : i32
    return %c0_i32, %c0_i32_0 : i32, i32
  }
  func.func @transform_5(%arg0: i32) -> (i32, i32) {
    %c0_i32 = arith.constant 0 : i32
    %c0_i32_0 = arith.constant 0 : i32
    %c0_i32_1 = arith.constant 0 : i32
    return %c0_i32, %c0_i32_0 : i32, i32
  }
  func.func @transform_6(%arg0: i32) -> (i32, i32) {
    %c0_i32 = arith.constant 0 : i32
    %c0_i32_0 = arith.constant 0 : i32
    %c0_i32_1 = arith.constant 0 : i32
    return %c0_i32, %c0_i32_0 : i32, i32
  }
  func.func @transform_7(%arg0: i32) -> (i32, i32) {
    %c0_i32 = arith.constant 0 : i32
    %c0_i32_0 = arith.constant 0 : i32
    %c0_i32_1 = arith.constant 0 : i32
    return %c0_i32, %c0_i32_0 : i32, i32
  }
  func.func @transform_8(%arg0: i32) -> (i32, i32) {
    %c0_i32 = arith.constant 0 : i32
    %c0_i32_0 = arith.constant 0 : i32
    %c0_i32_1 = arith.constant 0 : i32
    return %c0_i32, %c0_i32_0 : i32, i32
  }
  func.func @transform_9(%arg0: i32) -> (i32, i32) {
    %c0_i32 = arith.constant 0 : i32
    %c0_i32_0 = arith.constant 0 : i32
    return %c0_i32, %arg0 : i32, i32
  }
}

</mosaic_0001>

<llo_original>
// kernel: tpu_custom_call.1
$region0: #{tpu_custom_call.1}
  #allocation0 [shape = 'u32[]', space=smem, size = 0x4, offset = 0x4, fixed_abs, tag = 'smem constant byte address 0x4 - core index']
  #allocation1 [shape = 'u32[144,128]{1,0:T(1,128)}', space=vmem, size = 0x12000, scoped, tag = 'internal scratch']
  %s0 = inlined_call_operand.vmem [shape: f32[4,128], index: 0, kind: input, shape index: {}]
  %s1 = inlined_call_operand.vmem [shape: bf16[32,4], index: 1, kind: input, shape index: {}]
  %s2 = inlined_call_operand.vmem [shape: f32[32,1], index: 2, kind: input, shape index: {}]
  %s3 = inlined_call_operand.vmem [shape: bf16[64,32], index: 3, kind: input, shape index: {}]
  %s4 = inlined_call_operand.vmem [shape: f32[64,1], index: 4, kind: input, shape index: {}]
  %s5 = inlined_call_operand.vmem [shape: bf16[128,64], index: 5, kind: input, shape index: {}]
  %s6 = inlined_call_operand.vmem [shape: f32[128,1], index: 6, kind: input, shape index: {}]
  %s7 = inlined_call_operand.vmem [shape: bf16[8,128], index: 7, kind: input, shape index: {}]
  %s8 = inlined_call_operand.vmem [shape: f32[8,1], index: 8, kind: input, shape index: {}]
  %s9 = inlined_call_operand.hbm [shape: f32[8,128], index: 9, kind: output, shape index: {}]
  %s10 = sld [smem:[#allocation0]]
  $region46: #{tpu_custom_call.1} parent=0
    _
  %s12 = ssub.s32 1, %s10
  %s13 = scalar_select 0, %s12, %s10
  $region1: #{tpu_custom_call.1} parent=0
    #allocation2 [shape = 'u8[4096]{0}', space=vmem, size = 0x1000, scoped, tag = 'output window, operand 0, single buffered']
    #allocation3 [shape = 's32[1]{0}', space=sflag, size = 0x4, scoped, tag = 'scoped memory for tpu_custom_call.1']
    %14 = vsyncpa [#allocation3], 0
    // Predicated region
    $region2: #{tpu_custom_call.1} parent=1 // pred_check
      _
    $region3: #{tpu_custom_call.1} parent=1 // pred_check_branch
      %16 = sbr.rel (0) target = $region5
    $region4: #{tpu_custom_call.1} parent=1 // pred_region
      _
    $region5: #{tpu_custom_call.1} parent=1 // pred_fallthru
      _
    // Predicated region
    $region6: #{tpu_custom_call.1} parent=1 // pred_check
      _
    $region7: #{tpu_custom_call.1} parent=1 // pred_check_branch
      %18 = sbr.rel (0) target = $region9
    $region8: #{tpu_custom_call.1} parent=1 // pred_region
      _
    $region9: #{tpu_custom_call.1} parent=1 // pred_fallthru
      _
    // Predicated region
    $region10: #{tpu_custom_call.1} parent=1 // pred_check
      _
    $region11: #{tpu_custom_call.1} parent=1 // pred_check_branch
      %20 = sbr.rel (0) target = $region13
    $region12: #{tpu_custom_call.1} parent=1 // pred_region
      _
    $region13: #{tpu_custom_call.1} parent=1 // pred_fallthru
      _
    // Predicated region
    $region14: #{tpu_custom_call.1} parent=1 // pred_check
      _
    $region15: #{tpu_custom_call.1} parent=1 // pred_check_branch
      %22 = sbr.rel (0) target = $region17
    $region16: #{tpu_custom_call.1} parent=1 // pred_region
      _
    $region17: #{tpu_custom_call.1} parent=1 // pred_fallthru
      _
    // Predicated region
    $region18: #{tpu_custom_call.1} parent=1 // pred_check
      _
    $region19: #{tpu_custom_call.1} parent=1 // pred_check_branch
      %24 = sbr.rel (0) target = $region21
    $region20: #{tpu_custom_call.1} parent=1 // pred_region
      _
    $region21: #{tpu_custom_call.1} parent=1 // pred_fallthru
      _
    // Predicated region
    $region22: #{tpu_custom_call.1} parent=1 // pred_check
      _
    $region23: #{tpu_custom_call.1} parent=1 // pred_check_branch
      %26 = sbr.rel (0) target = $region25
    $region24: #{tpu_custom_call.1} parent=1 // pred_region
      _
    $region25: #{tpu_custom_call.1} parent=1 // pred_fallthru
      _
    // Predicated region
    $region26: #{tpu_custom_call.1} parent=1 // pred_check
      _
    $region27: #{tpu_custom_call.1} parent=1 // pred_check_branch
      %28 = sbr.rel (0) target = $region29
    $region28: #{tpu_custom_call.1} parent=1 // pred_region
      _
    $region29: #{tpu_custom_call.1} parent=1 // pred_fallthru
      _
    // Predicated region
    $region30: #{tpu_custom_call.1} parent=1 // pred_check
      _
    $region31: #{tpu_custom_call.1} parent=1 // pred_check_branch
      %30 = sbr.rel (0) target = $region33
    $region32: #{tpu_custom_call.1} parent=1 // pred_region
      _
    $region33: #{tpu_custom_call.1} parent=1 // pred_fallthru
      _
    // Predicated region
    $region34: #{tpu_custom_call.1} parent=1 // pred_check
      _
    $region35: #{tpu_custom_call.1} parent=1 // pred_check_branch
      %32 = sbr.rel (0) target = $region37
    $region36: #{tpu_custom_call.1} parent=1 // pred_region
      _
    $region37: #{tpu_custom_call.1} parent=1 // pred_fallthru
      _
    %v34 = vld [vmem:[%s0] sm:$0xf]
    %v35 = vpack.c.bf16 %v34, %v34
    %v36 = vld [vmem:[%s1] sm:$0xf]
    %v37 = vld [vmem:[%s1 + $0x4] sm:$0xf]
    %v38 = vld [vmem:[%s1 + $0x8] sm:$0xf]
    %v39 = vld [vmem:[%s1 + $0xc] sm:$0xf]
    %v40 = vld [vmem:[%s2] sm:$0xff]
    %v41 = vld [vmem:[%s2 + $0x8] sm:$0xff]
    %v42 = vld [vmem:[%s2 + $0x10] sm:$0xff]
    %v43 = vld [vmem:[%s2 + $0x18] sm:$0xff]
    %45 = vset.pattern.permute.xlu0 0
    %46 = vperm.xlu0 %45, %v40
    %v47 = vpop.permute.xlu0 %46
    %50 = vset.pattern.permute.xlu0 0
    %51 = vperm.xlu0 %50, %v41
    %v52 = vpop.permute.xlu0 %51
    %55 = vset.pattern.permute.xlu0 0
    %56 = vperm.xlu0 %55, %v42
    %v57 = vpop.permute.xlu0 %56
    %60 = vset.pattern.permute.xlu0 0
    %61 = vperm.xlu0 %60, %v43
    %v62 = vpop.permute.xlu0 %61
    %v68 = vunpack.c.l.b16 %v36
    %v69 = vunpack.c.l.b16 %v37
    %v70 = vunpack.c.l.b16 %v38
    %v71 = vunpack.c.l.b16 %v39
    %v72 = vpack.c.b16 %v69, %v68
    %v73 = vpack.c.b16 %v71, %v70
    %vm74 = vcmask 31744
    %v76 = vsel %vm74, %v72, 0
    %v79 = vsel %vm74, %v73, 0
    %vm81 = vcmask 1041408
    %v83 = vsel %vm81, %v35, 0
    %85 = vmatprep.subr.bf16.mxu0 0
    %86 = vmatpush1.bf16.msra.mxu0 %v83
    %87 = vmatprep.subr.bf16.mxu0 0
    %88 = vmatpush1.bf16.msra.mxu0 0
    %89 = vmatprep.subr.bf16.mxu0 0
    %90 = vmatpush1.bf16.msra.mxu0 0
    %91 = vmatprep.subr.bf16.mxu0 0
    %92 = vmatpush1.bf16.msra.mxu0 0
    %93 = vmatprep.subr.bf16.mxu0 0
    %94 = vmatpush1.bf16.msra.mxu0 0
    %95 = vmatprep.subr.bf16.mxu0 0
    %96 = vmatpush1.bf16.msra.mxu0 0
    %97 = vmatprep.subr.bf16.mxu0 0
    %98 = vmatpush1.bf16.msra.mxu0 0
    %99 = vmatprep.subr.bf16.mxu0 0
    %100 = vmatpush1.bf16.msra.mxu0 0
    %101 = vmatprep.subr.bf16.mxu0 0
    %102 = vmatpush1.bf16.msra.mxu0 0
    %103 = vmatprep.subr.bf16.mxu0 0
    %104 = vmatpush1.bf16.msra.mxu0 0
    %105 = vmatprep.subr.bf16.mxu0 0
    %106 = vmatpush1.bf16.msra.mxu0 0
    %107 = vmatprep.subr.bf16.mxu0 0
    %108 = vmatpush1.bf16.msra.mxu0 0
    %109 = vmatprep.subr.bf16.mxu0 0
    %110 = vmatpush1.bf16.msra.mxu0 0
    %111 = vmatprep.subr.bf16.mxu0 0
    %112 = vmatpush1.bf16.msra.mxu0 0
    %113 = vmatprep.subr.bf16.mxu0 0
    %114 = vmatpush1.bf16.msra.mxu0 0
    %115 = vmatprep.subr.bf16.mxu0 0
    %116 = vmatpush1.bf16.msra.mxu0 0
    %117 = vmatprep.mubr.bf16.mxu0 0
    %118 = vmatmul.mubr.bf16.gmra.mrb[0].mxu0 %v76
    %v119 = vpop.f32.mrb[0].mxu0
    %v120 = vadd.f32 %v47, %v119
    %v121 = vpop.f32.mrb[0].mxu0
    %v122 = vpop.f32.mrb[0].mxu0
    %v123 = vadd.f32 %v52, %v122
    %v124 = vpop.f32.mrb[0].mxu0
    %125 = vmatprep.mubr.bf16.mxu0 0
    %126 = vmatmul.mubr.bf16.gmra.mrb[0].mxu0 %v79
    %v127 = vpop.f32.mrb[0].mxu0
    %v128 = vadd.f32 %v57, %v127
    %v129 = vpop.f32.mrb[0].mxu0
    %v130 = vpop.f32.mrb[0].mxu0
    %v131 = vadd.f32 %v62, %v130
    %v132 = vpop.f32.mrb[0].mxu0
    %133 = vdwg.mxu0
    %v134 = vmax.f32 %v120, 0.0
    %v135 = vmax.f32 %v123, 0.0
    %v136 = vmax.f32 %v128, 0.0
    %v137 = vmax.f32 %v131, 0.0
    %v138 = vpack.c.bf16 %v135, %v134
    %v139 = vpack.c.bf16 %v137, %v136
    %v140 = vld [vmem:[%s3] sm:$0xf]
    %v141 = vld [vmem:[%s3 + $0x4] sm:$0xf]
    %v142 = vld [vmem:[%s3 + $0x8] sm:$0xf]
    %v143 = vld [vmem:[%s3 + $0xc] sm:$0xf]
    %v144 = vld [vmem:[%s3 + $0x10] sm:$0xf]
    %v145 = vld [vmem:[%s3 + $0x14] sm:$0xf]
    %v146 = vld [vmem:[%s3 + $0x18] sm:$0xf]
    %v147 = vld [vmem:[%s3 + $0x1c] sm:$0xf]
    %v148 = vld [vmem:[%s4] sm:$0xff]
    %v149 = vld [vmem:[%s4 + $0x8] sm:$0xff]
    %v150 = vld [vmem:[%s4 + $0x10] sm:$0xff]
    %v151 = vld [vmem:[%s4 + $0x18] sm:$0xff]
    %v152 = vld [vmem:[%s4 + $0x20] sm:$0xff]
    %v153 = vld [vmem:[%s4 + $0x28] sm:$0xff]
    %v154 = vld [vmem:[%s4 + $0x30] sm:$0xff]
    %v155 = vld [vmem:[%s4 + $0x38] sm:$0xff]
    %157 = vset.pattern.permute.xlu0 0
    %158 = vperm.xlu0 %157, %v148
    %v159 = vpop.permute.xlu0 %158
    %162 = vset.pattern.permute.xlu0 0
    %163 = vperm.xlu0 %162, %v149
    %v164 = vpop.permute.xlu0 %163
    %167 = vset.pattern.permute.xlu0 0
    %168 = vperm.xlu0 %167, %v150
    %v169 = vpop.permute.xlu0 %168
    %172 = vset.pattern.permute.xlu0 0
    %173 = vperm.xlu0 %172, %v151
    %v174 = vpop.permute.xlu0 %173
    %177 = vset.pattern.permute.xlu0 0
    %178 = vperm.xlu0 %177, %v152
    %v179 = vpop.permute.xlu0 %178
    %182 = vset.pattern.permute.xlu0 0
    %183 = vperm.xlu0 %182, %v153
    %v184 = vpop.permute.xlu0 %183
    %187 = vset.pattern.permute.xlu0 0
    %188 = vperm.xlu0 %187, %v154
    %v189 = vpop.permute.xlu0 %188
    %192 = vset.pattern.permute.xlu0 0
    %193 = vperm.xlu0 %192, %v155
    %v194 = vpop.permute.xlu0 %193
    %v204 = vunpack.c.l.b16 %v140
    %v205 = vunpack.c.l.b16 %v141
    %v206 = vunpack.c.l.b16 %v142
    %v207 = vunpack.c.l.b16 %v143
    %v208 = vunpack.c.l.b16 %v144
    %v209 = vunpack.c.l.b16 %v145
    %v210 = vunpack.c.l.b16 %v146
    %v211 = vunpack.c.l.b16 %v147
    %v212 = vpack.c.b16 %v205, %v204
    %v213 = vpack.c.b16 %v207, %v206
    %v214 = vpack.c.b16 %v209, %v208
    %v215 = vpack.c.b16 %v211, %v210
    %vm216 = vcmask 261120
    %v218 = vsel %vm216, %v212, 0
    %v221 = vsel %vm216, %v213, 0
    %v224 = vsel %vm216, %v214, 0
    %v227 = vsel %vm216, %v215, 0
    %229 = vmatprep.subr.bf16.mxu0 0
    %230 = vmatpush1.bf16.msra.mxu0 %v138
    %231 = vmatprep.subr.bf16.mxu0 0
    %232 = vmatpush1.bf16.msra.mxu0 %v139
    %233 = vmatprep.subr.bf16.mxu0 0
    %234 = vmatpush1.bf16.msra.mxu0 0
    %235 = vmatprep.subr.bf16.mxu0 0
    %236 = vmatpush1.bf16.msra.mxu0 0
    %237 = vmatprep.subr.bf16.mxu0 0
    %238 = vmatpush1.bf16.msra.mxu0 0
    %239 = vmatprep.subr.bf16.mxu0 0
    %240 = vmatpush1.bf16.msra.mxu0 0
    %241 = vmatprep.subr.bf16.mxu0 0
    %242 = vmatpush1.bf16.msra.mxu0 0
    %243 = vmatprep.subr.bf16.mxu0 0
    %244 = vmatpush1.bf16.msra.mxu0 0
    %245 = vmatprep.subr.bf16.mxu0 0
    %246 = vmatpush1.bf16.msra.mxu0 0
    %247 = vmatprep.subr.bf16.mxu0 0
    %248 = vmatpush1.bf16.msra.mxu0 0
    %249 = vmatprep.subr.bf16.mxu0 0
    %250 = vmatpush1.bf16.msra.mxu0 0
    %251 = vmatprep.subr.bf16.mxu0 0
    %252 = vmatpush1.bf16.msra.mxu0 0
    %253 = vmatprep.subr.bf16.mxu0 0
    %254 = vmatpush1.bf16.msra.mxu0 0
    %255 = vmatprep.subr.bf16.mxu0 0
    %256 = vmatpush1.bf16.msra.mxu0 0
    %257 = vmatprep.subr.bf16.mxu0 0
    %258 = vmatpush1.bf16.msra.mxu0 0
    %259 = vmatprep.subr.bf16.mxu0 0
    %260 = vmatpush1.bf16.msra.mxu0 0
    %261 = vmatprep.mubr.bf16.mxu0 0
    %262 = vmatmul.mubr.bf16.gmra.mrb[0].mxu0 %v218
    %v263 = vpop.f32.mrb[0].mxu0
    %v264 = vadd.f32 %v159, %v263
    %v265 = vpop.f32.mrb[0].mxu0
    %v266 = vpop.f32.mrb[0].mxu0
    %v267 = vadd.f32 %v164, %v266
    %v268 = vpop.f32.mrb[0].mxu0
    %269 = vmatprep.mubr.bf16.mxu0 0
    %270 = vmatmul.mubr.bf16.gmra.mrb[0].mxu0 %v221
    %v271 = vpop.f32.mrb[0].mxu0
    %v272 = vadd.f32 %v169, %v271
    %v273 = vpop.f32.mrb[0].mxu0
    %v274 = vpop.f32.mrb[0].mxu0
    %v275 = vadd.f32 %v174, %v274
    %v276 = vpop.f32.mrb[0].mxu0
    %277 = vmatprep.mubr.bf16.mxu0 0
    %278 = vmatmul.mubr.bf16.gmra.mrb[0].mxu0 %v224
    %v279 = vpop.f32.mrb[0].mxu0
    %v280 = vadd.f32 %v179, %v279
    %v281 = vpop.f32.mrb[0].mxu0
    %v282 = vpop.f32.mrb[0].mxu0
    %v283 = vadd.f32 %v184, %v282
    %v284 = vpop.f32.mrb[0].mxu0
    %285 = vmatprep.mubr.bf16.mxu0 0
    %286 = vmatmul.mubr.bf16.gmra.mrb[0].mxu0 %v227
    %v287 = vpop.f32.mrb[0].mxu0
    %v288 = vadd.f32 %v189, %v287
    %v289 = vpop.f32.mrb[0].mxu0
    %v290 = vpop.f32.mrb[0].mxu0
    %v291 = vadd.f32 %v194, %v290
    %v292 = vpop.f32.mrb[0].mxu0
    %293 = vdwg.mxu0
    %v294 = vmax.f32 %v264, 0.0
    %v295 = vmax.f32 %v267, 0.0
    %v296 = vmax.f32 %v272, 0.0
    %v297 = vmax.f32 %v275, 0.0
    %v298 = vmax.f32 %v280, 0.0
    %v299 = vmax.f32 %v283, 0.0
    %v300 = vmax.f32 %v288, 0.0
    %v301 = vmax.f32 %v291, 0.0
    %v302 = vpack.c.bf16 %v295, %v294
    %v303 = vpack.c.bf16 %v297, %v296
    %v304 = vpack.c.bf16 %v299, %v298
    %v305 = vpack.c.bf16 %v301, %v300
    %v306 = vld [vmem:[%s5] sm:$0xf]
    %v307 = vld [vmem:[%s5 + $0x4] sm:$0xf]
    %v308 = vld [vmem:[%s5 + $0x8] sm:$0xf]
    %v309 = vld [vmem:[%s5 + $0xc] sm:$0xf]
    %v310 = vld [vmem:[%s5 + $0x10] sm:$0xf]
    %v311 = vld [vmem:[%s5 + $0x14] sm:$0xf]
    %v312 = vld [vmem:[%s5 + $0x18] sm:$0xf]
    %v313 = vld [vmem:[%s5 + $0x1c] sm:$0xf]
    %v314 = vld [vmem:[%s5 + $0x20] sm:$0xf]
    %v315 = vld [vmem:[%s5 + $0x24] sm:$0xf]
    %v316 = vld [vmem:[%s5 + $0x28] sm:$0xf]
    %v317 = vld [vmem:[%s5 + $0x2c] sm:$0xf]
    %v318 = vld [vmem:[%s5 + $0x30] sm:$0xf]
    %v319 = vld [vmem:[%s5 + $0x34] sm:$0xf]
    %v320 = vld [vmem:[%s5 + $0x38] sm:$0xf]
    %v321 = vld [vmem:[%s5 + $0x3c] sm:$0xf]
    %v322 = vld [vmem:[%s6] sm:$0xff]
    %v323 = vld [vmem:[%s6 + $0x8] sm:$0xff]
    %v324 = vld [vmem:[%s6 + $0x10] sm:$0xff]
    %v325 = vld [vmem:[%s6 + $0x18] sm:$0xff]
    %v326 = vld [vmem:[%s6 + $0x20] sm:$0xff]
    %v327 = vld [vmem:[%s6 + $0x28] sm:$0xff]
    %v328 = vld [vmem:[%s6 + $0x30] sm:$0xff]
    %v329 = vld [vmem:[%s6 + $0x38] sm:$0xff]
    %v330 = vld [vmem:[%s6 + $0x40] sm:$0xff]
    %v331 = vld [vmem:[%s6 + $0x48] sm:$0xff]
    %v332 = vld [vmem:[%s6 + $0x50] sm:$0xff]
    %v333 = vld [vmem:[%s6 + $0x58] sm:$0xff]
    %v334 = vld [vmem:[%s6 + $0x60] sm:$0xff]
    %v335 = vld [vmem:[%s6 + $0x68] sm:$0xff]
    %v336 = vld [vmem:[%s6 + $0x70] sm:$0xff]
    %v337 = vld [vmem:[%s6 + $0x78] sm:$0xff]
    %339 = vset.pattern.permute.xlu0 0
    %340 = vperm.xlu0 %339, %v322
    %v341 = vpop.permute.xlu0 %340
    %344 = vset.pattern.permute.xlu0 0
    %345 = vperm.xlu0 %344, %v323
    %v346 = vpop.permute.xlu0 %345
    %349 = vset.pattern.permute.xlu0 0
    %350 = vperm.xlu0 %349, %v324
    %v351 = vpop.permute.xlu0 %350
    %354 = vset.pattern.permute.xlu0 0
    %355 = vperm.xlu0 %354, %v325
    %v356 = vpop.permute.xlu0 %355
    %359 = vset.pattern.permute.xlu0 0
    %360 = vperm.xlu0 %359, %v326
    %v361 = vpop.permute.xlu0 %360
    %364 = vset.pattern.permute.xlu0 0
    %365 = vperm.xlu0 %364, %v327
    %v366 = vpop.permute.xlu0 %365
    %369 = vset.pattern.permute.xlu0 0
    %370 = vperm.xlu0 %369, %v328
    %v371 = vpop.permute.xlu0 %370
    %374 = vset.pattern.permute.xlu0 0
    %375 = vperm.xlu0 %374, %v329
    %v376 = vpop.permute.xlu0 %375
    %379 = vset.pattern.permute.xlu0 0
    %380 = vperm.xlu0 %379, %v330
    %v381 = vpop.permute.xlu0 %380
    %384 = vset.pattern.permute.xlu0 0
    %385 = vperm.xlu0 %384, %v331
    %v386 = vpop.permute.xlu0 %385
    %389 = vset.pattern.permute.xlu0 0
    %390 = vperm.xlu0 %389, %v332
    %v391 = vpop.permute.xlu0 %390
    %394 = vset.pattern.permute.xlu0 0
    %395 = vperm.xlu0 %394, %v333
    %v396 = vpop.permute.xlu0 %395
    %399 = vset.pattern.permute.xlu0 0
    %400 = vperm.xlu0 %399, %v334
    %v401 = vpop.permute.xlu0 %400
    %404 = vset.pattern.permute.xlu0 0
    %405 = vperm.xlu0 %404, %v335
    %v406 = vpop.permute.xlu0 %405
    %409 = vset.pattern.permute.xlu0 0
    %410 = vperm.xlu0 %409, %v336
    %v411 = vpop.permute.xlu0 %410
    %414 = vset.pattern.permute.xlu0 0
    %415 = vperm.xlu0 %414, %v337
    %v416 = vpop.permute.xlu0 %415
    %v434 = vunpack.c.l.b16 %v306
    %v435 = vunpack.c.l.b16 %v307
    %v436 = vunpack.c.l.b16 %v308
    %v437 = vunpack.c.l.b16 %v309
    %v438 = vunpack.c.l.b16 %v310
    %v439 = vunpack.c.l.b16 %v311
    %v440 = vunpack.c.l.b16 %v312
    %v441 = vunpack.c.l.b16 %v313
    %v442 = vunpack.c.l.b16 %v314
    %v443 = vunpack.c.l.b16 %v315
    %v444 = vunpack.c.l.b16 %v316
    %v445 = vunpack.c.l.b16 %v317
    %v446 = vunpack.c.l.b16 %v318
    %v447 = vunpack.c.l.b16 %v319
    %v448 = vunpack.c.l.b16 %v320
    %v449 = vunpack.c.l.b16 %v321
    %v450 = vpack.c.b16 %v435, %v434
    %v451 = vpack.c.b16 %v437, %v436
    %v452 = vpack.c.b16 %v439, %v438
    %v453 = vpack.c.b16 %v441, %v440
    %v454 = vpack.c.b16 %v443, %v442
    %v455 = vpack.c.b16 %v445, %v444
    %v456 = vpack.c.b16 %v447, %v446
    %v457 = vpack.c.b16 %v449, %v448
    %vm458 = vcmask 523264
    %v460 = vsel %vm458, %v450, 0
    %v463 = vsel %vm458, %v451, 0
    %v466 = vsel %vm458, %v452, 0
    %v469 = vsel %vm458, %v453, 0
    %v472 = vsel %vm458, %v454, 0
    %v475 = vsel %vm458, %v455, 0
    %v478 = vsel %vm458, %v456, 0
    %v481 = vsel %vm458, %v457, 0
    %483 = vmatprep.subr.bf16.mxu0 0
    %484 = vmatpush1.bf16.msra.mxu0 %v302
    %485 = vmatprep.subr.bf16.mxu0 0
    %486 = vmatpush1.bf16.msra.mxu0 %v303
    %487 = vmatprep.subr.bf16.mxu0 0
    %488 = vmatpush1.bf16.msra.mxu0 %v304
    %489 = vmatprep.subr.bf16.mxu0 0
    %490 = vmatpush1.bf16.msra.mxu0 %v305
    %491 = vmatprep.subr.bf16.mxu0 0
    %492 = vmatpush1.bf16.msra.mxu0 0
    %493 = vmatprep.subr.bf16.mxu0 0
    %494 = vmatpush1.bf16.msra.mxu0 0
    %495 = vmatprep.subr.bf16.mxu0 0
    %496 = vmatpush1.bf16.msra.mxu0 0
    %497 = vmatprep.subr.bf16.mxu0 0
    %498 = vmatpush1.bf16.msra.mxu0 0
    %499 = vmatprep.subr.bf16.mxu0 0
    %500 = vmatpush1.bf16.msra.mxu0 0
    %501 = vmatprep.subr.bf16.mxu0 0
    %502 = vmatpush1.bf16.msra.mxu0 0
    %503 = vmatprep.subr.bf16.mxu0 0
    %504 = vmatpush1.bf16.msra.mxu0 0
    %505 = vmatprep.subr.bf16.mxu0 0
    %506 = vmatpush1.bf16.msra.mxu0 0
    %507 = vmatprep.subr.bf16.mxu0 0
    %508 = vmatpush1.bf16.msra.mxu0 0
    %509 = vmatprep.subr.bf16.mxu0 0
    %510 = vmatpush1.bf16.msra.mxu0 0
    %511 = vmatprep.subr.bf16.mxu0 0
    %512 = vmatpush1.bf16.msra.mxu0 0
    %513 = vmatprep.subr.bf16.mxu0 0
    %514 = vmatpush1.bf16.msra.mxu0 0
    %515 = vmatprep.mubr.bf16.mxu0 0
    %516 = vmatmul.mubr.bf16.gmra.mrb[0].mxu0 %v460
    %v517 = vpop.f32.mrb[0].mxu0
    %v518 = vadd.f32 %v341, %v517
    %v519 = vpop.f32.mrb[0].mxu0
    %v520 = vpop.f32.mrb[0].mxu0
    %v521 = vadd.f32 %v346, %v520
    %v522 = vpop.f32.mrb[0].mxu0
    %523 = vmatprep.mubr.bf16.mxu0 0
    %524 = vmatmul.mubr.bf16.gmra.mrb[0].mxu0 %v463
    %v525 = vpop.f32.mrb[0].mxu0
    %v526 = vadd.f32 %v351, %v525
    %v527 = vpop.f32.mrb[0].mxu0
    %v528 = vpop.f32.mrb[0].mxu0
    %v529 = vadd.f32 %v356, %v528
    %v530 = vpop.f32.mrb[0].mxu0
    %531 = vmatprep.mubr.bf16.mxu0 0
    %532 = vmatmul.mubr.bf16.gmra.mrb[0].mxu0 %v466
    %v533 = vpop.f32.mrb[0].mxu0
    %v534 = vadd.f32 %v361, %v533
    %v535 = vpop.f32.mrb[0].mxu0
    %v536 = vpop.f32.mrb[0].mxu0
    %v537 = vadd.f32 %v366, %v536
    %v538 = vpop.f32.mrb[0].mxu0
    %539 = vmatprep.mubr.bf16.mxu0 0
    %540 = vmatmul.mubr.bf16.gmra.mrb[0].mxu0 %v469
    %v541 = vpop.f32.mrb[0].mxu0
    %v542 = vadd.f32 %v371, %v541
    %v543 = vpop.f32.mrb[0].mxu0
    %v544 = vpop.f32.mrb[0].mxu0
    %v545 = vadd.f32 %v376, %v544
    %v546 = vpop.f32.mrb[0].mxu0
    %547 = vmatprep.mubr.bf16.mxu0 0
    %548 = vmatmul.mubr.bf16.gmra.mrb[0].mxu0 %v472
    %v549 = vpop.f32.mrb[0].mxu0
    %v550 = vadd.f32 %v381, %v549
    %v551 = vpop.f32.mrb[0].mxu0
    %v552 = vpop.f32.mrb[0].mxu0
    %v553 = vadd.f32 %v386, %v552
    %v554 = vpop.f32.mrb[0].mxu0
    %555 = vmatprep.mubr.bf16.mxu0 0
    %556 = vmatmul.mubr.bf16.gmra.mrb[0].mxu0 %v475
    %v557 = vpop.f32.mrb[0].mxu0
    %v558 = vadd.f32 %v391, %v557
    %v559 = vpop.f32.mrb[0].mxu0
    %v560 = vpop.f32.mrb[0].mxu0
    %v561 = vadd.f32 %v396, %v560
    %v562 = vpop.f32.mrb[0].mxu0
    %563 = vmatprep.mubr.bf16.mxu0 0
    %564 = vmatmul.mubr.bf16.gmra.mrb[0].mxu0 %v478
    %v565 = vpop.f32.mrb[0].mxu0
    %v566 = vadd.f32 %v401, %v565
    %v567 = vpop.f32.mrb[0].mxu0
    %v568 = vpop.f32.mrb[0].mxu0
    %v569 = vadd.f32 %v406, %v568
    %v570 = vpop.f32.mrb[0].mxu0
    %571 = vmatprep.mubr.bf16.mxu0 0
    %572 = vmatmul.mubr.bf16.gmra.mrb[0].mxu0 %v481
    %v573 = vpop.f32.mrb[0].mxu0
    %v574 = vadd.f32 %v411, %v573
    %v575 = vpop.f32.mrb[0].mxu0
    %v576 = vpop.f32.mrb[0].mxu0
    %v577 = vadd.f32 %v416, %v576
    %v578 = vpop.f32.mrb[0].mxu0
    %579 = vdwg.mxu0
    %v580 = vmax.f32 %v518, 0.0
    %v581 = vmax.f32 %v521, 0.0
    %v582 = vmax.f32 %v526, 0.0
    %v583 = vmax.f32 %v529, 0.0
    %v584 = vmax.f32 %v534, 0.0
    %v585 = vmax.f32 %v537, 0.0
    %v586 = vmax.f32 %v542, 0.0
    %v587 = vmax.f32 %v545, 0.0
    %v588 = vmax.f32 %v550, 0.0
    %v589 = vmax.f32 %v553, 0.0
    %v590 = vmax.f32 %v558, 0.0
    %v591 = vmax.f32 %v561, 0.0
    %v592 = vmax.f32 %v566, 0.0
    %v593 = vmax.f32 %v569, 0.0
    %v594 = vmax.f32 %v574, 0.0
    %v595 = vmax.f32 %v577, 0.0
    %v596 = vpack.c.bf16 %v581, %v580
    %v597 = vpack.c.bf16 %v583, %v582
    %v598 = vpack.c.bf16 %v585, %v584
    %v599 = vpack.c.bf16 %v587, %v586
    %v600 = vpack.c.bf16 %v589, %v588
    %v601 = vpack.c.bf16 %v591, %v590
    %v602 = vpack.c.bf16 %v593, %v592
    %v603 = vpack.c.bf16 %v595, %v594
    %v604 = vld [vmem:[%s7] sm:$0xf]
    %v605 = vld [vmem:[%s8] sm:$0xff]
    %607 = vset.pattern.permute.xlu0 0
    %608 = vperm.xlu0 %607, %v605
    %v609 = vpop.permute.xlu0 %608
    %611 = vmatprep.subr.bf16.mxu0 0
    %612 = vmatpush1.bf16.msra.mxu0 %v596
    %613 = vmatprep.subr.bf16.mxu0 0
    %614 = vmatpush1.bf16.msra.mxu0 %v597
    %615 = vmatprep.subr.bf16.mxu0 0
    %616 = vmatpush1.bf16.msra.mxu0 %v598
    %617 = vmatprep.subr.bf16.mxu0 0
    %618 = vmatpush1.bf16.msra.mxu0 %v599
    %619 = vmatprep.subr.bf16.mxu0 0
    %620 = vmatpush1.bf16.msra.mxu0 %v600
    %621 = vmatprep.subr.bf16.mxu0 0
    %622 = vmatpush1.bf16.msra.mxu0 %v601
    %623 = vmatprep.subr.bf16.mxu0 0
    %624 = vmatpush1.bf16.msra.mxu0 %v602
    %625 = vmatprep.subr.bf16.mxu0 0
    %626 = vmatpush1.bf16.msra.mxu0 %v603
    %627 = vmatprep.subr.bf16.mxu0 0
    %628 = vmatpush1.bf16.msra.mxu0 0
    %629 = vmatprep.subr.bf16.mxu0 0
    %630 = vmatpush1.bf16.msra.mxu0 0
    %631 = vmatprep.subr.bf16.mxu0 0
    %632 = vmatpush1.bf16.msra.mxu0 0
    %633 = vmatprep.subr.bf16.mxu0 0
    %634 = vmatpush1.bf16.msra.mxu0 0
    %635 = vmatprep.subr.bf16.mxu0 0
    %636 = vmatpush1.bf16.msra.mxu0 0
    %637 = vmatprep.subr.bf16.mxu0 0
    %638 = vmatpush1.bf16.msra.mxu0 0
    %639 = vmatprep.subr.bf16.mxu0 0
    %640 = vmatpush1.bf16.msra.mxu0 0
    %641 = vmatprep.subr.bf16.mxu0 0
    %642 = vmatpush1.bf16.msra.mxu0 0
    %643 = vmatprep.mubr.bf16.mxu0 0
    %644 = vmatmul.mubr.bf16.gmra.mrb[0].mxu0 %v604
    %v645 = vpop.f32.mrb[0].mxu0
    %v646 = vadd.f32 %v609, %v645
    %v647 = vpop.f32.mrb[0].mxu0
    %v648 = vpop.f32.mrb[0].mxu0
    %v649 = vpop.f32.mrb[0].mxu0
    %650 = vdwg.mxu0
    %651 = vst [vmem:[#allocation2] sm:$0xff] %v646
    // Predicated region
    $region38: #{tpu_custom_call.1} parent=1 // pred_check
      _
    $region39: #{tpu_custom_call.1} parent=1 // pred_check_branch
      %653 = sbr.rel (0) target = $region41
    $region40: #{tpu_custom_call.1} parent=1 // pred_region
      %s655 = ssub.s32 128, 128
      %656 = vsyncadd [#allocation3], %s655
      %s658 = sshll.u32 [#allocation2], 4
      %s659 = int_to_ptr.vmem [resolvable:$true] %s658
      %661 = dma.vmem_to_hbm [thread:$0]  %s659, 128, %s9, [#allocation3]
    $region41: #{tpu_custom_call.1} parent=1 // pred_fallthru
      _
    // Predicated region
    $region42: #{tpu_custom_call.1} parent=1 // pred_check
      _
    $region43: #{tpu_custom_call.1} parent=1 // pred_check_branch
      %663 = sbr.rel (0) target = $region45
    $region44: #{tpu_custom_call.1} parent=1 // pred_region
      %664 = dma.done [#allocation3], 128
    $region45: #{tpu_custom_call.1} parent=1 // pred_fallthru
      _
    %665 = vsyncpa [#allocation3], 1

</llo_original>
